<compile_context>
chip_gen: v7x
topology: tpu7x:2x2x1
jax: 0.10.0
libtpu: 0.0.40
codegen_flags: <defaults>
</compile_context>

<pallas_src>
import functools

import jax
import jax.numpy as jnp
from jax.experimental import pallas as pl
from jax.experimental.pallas import tpu as pltpu

LANE = 128          # internal lane padding for hidden feature dims
NUM_LAYERS = 4


def mlp_kernel(x_ref, w0_ref, w_ref, b_ref, o_ref, *, out_dim, last_relu):
    """Fused 4-layer MLP on one (TB, in_features) batch tile.

    x_ref  : (TB, F_in)        bf16  true-width activations
    w0_ref : (F_in, 128)       bf16  layer-0 weight, out-dim zero-padded
    w_ref  : (3, 128, 128)     bf16  stacked zero-padded weights, layers 1..3
    b_ref  : (4, 1, 128)       f32   stacked zero-padded biases
    o_ref  : (TB, out_dim)     f32   true-width output
    """
    # Layer 0: (TB, F_in) @ (F_in, 128) -- K underuses the MXU, but MXU is idle.
    acc = jnp.dot(x_ref[...], w0_ref[...], preferred_element_type=jnp.float32)
    h = jnp.maximum(acc + b_ref[0], 0.0).astype(jnp.bfloat16)

    for k in range(1, NUM_LAYERS):               # static unroll, 3 more MXU passes
        acc = jnp.dot(h, w_ref[k - 1], preferred_element_type=jnp.float32)
        acc = acc + b_ref[k]
        if k < NUM_LAYERS - 1:
            h = jnp.maximum(acc, 0.0).astype(jnp.bfloat16)
        else:
            if last_relu:                        # module default: last_activation==ReLU
                acc = jnp.maximum(acc, 0.0)
            # Narrow (out_dim-wide) store: masked vst, but store slots have
            # plenty of slack and the HBM writeback is 8x smaller.
            o_ref[...] = acc[:, :out_dim]


def _round_up(n, m):
    return ((n + m - 1) // m) * m


def pack_params(params):
    """Pack layer-0 weight at true fan-in; zero-pad/stack the rest to 128x128."""
    assert len(params) == NUM_LAYERS
    w0, b0 = params[0]
    fi0, fo0 = w0.shape
    w0_p = jnp.zeros((fi0, LANE), jnp.float32).at[:, :fo0].set(w0)

    w_rest = jnp.zeros((NUM_LAYERS - 1, LANE, LANE), jnp.float32)
    b_packed = jnp.zeros((NUM_LAYERS, 1, LANE), jnp.float32)
    b_packed = b_packed.at[0, :, :fo0].set(b0)
    for k, (w, b) in enumerate(params[1:], start=1):
        fi, fo = w.shape
        w_rest = w_rest.at[k - 1, :fi, :fo].set(w)
        b_packed = b_packed.at[k, :, :fo].set(b)
    return (w0_p.astype(jnp.bfloat16), w_rest.astype(jnp.bfloat16), b_packed)


def mlp_forward(x, params, batch_tile=None, apply_last_activation=True):
    """x: (B, in_features); params: list of 4 (W, b) with W=(in,out), b=(1,out)."""
    B, in_features = x.shape
    out_dim = params[-1][0].shape[1]

    w0_p, w_rest, b_packed = pack_params(params)

    # Batch tile: big tiles amortize the ~0.35 us/step grid cost.  Keep it a
    # multiple of 16 (bf16 packs 16 sublanes/vreg) and, when the batch is big
    # enough, keep >= 2 grid steps so both v7x TensorCores get work.
    if batch_tile is None:
        batch_tile = 1024
        batch_tile = min(batch_tile, max(_round_up(pl.cdiv(B, 2), 16), 16))
    else:
        batch_tile = max(_round_up(batch_tile, 16), 16)
    Bp = _round_up(B, batch_tile)

    # Sublane-pad batch to a tile multiple; keep the true feature width.
    xp = jnp.zeros((Bp, in_features), jnp.float32).at[:B].set(x)
    xp = xp.astype(jnp.bfloat16)

    grid = (Bp // batch_tile,)
    flops = 2 * Bp * (in_features * LANE + (NUM_LAYERS - 1) * LANE * LANE)
    bytes_accessed = (xp.size * 2 + w0_p.size * 2 + w_rest.size * 2
                      + b_packed.size * 4 + Bp * out_dim * 4)

    kernel = functools.partial(mlp_kernel, out_dim=out_dim,
                               last_relu=apply_last_activation)

    out_padded = pl.pallas_call(
        kernel,
        out_shape=jax.ShapeDtypeStruct((Bp, out_dim), jnp.float32),
        grid_spec=pltpu.PrefetchScalarGridSpec(
            num_scalar_prefetch=0,
            grid=grid,
            in_specs=[
                # streaming batch tile at true width (last dim == full array dim)
                pl.BlockSpec((batch_tile, in_features), lambda i: (i, 0)),
                # VMEM-resident packed weights / biases (constant index_map ->
                # single DMA, no re-fetch per grid step)
                pl.BlockSpec((in_features, LANE), lambda i: (0, 0)),
                pl.BlockSpec((NUM_LAYERS - 1, LANE, LANE), lambda i: (0, 0, 0)),
                pl.BlockSpec((NUM_LAYERS, 1, LANE), lambda i: (0, 0, 0)),
            ],
            out_specs=pl.BlockSpec((batch_tile, out_dim), lambda i: (i, 0)),
        ),
        compiler_params=pltpu.CompilerParams(
            dimension_semantics=("parallel",)),
        cost_estimate=pl.CostEstimate(
            flops=flops, transcendentals=0, bytes_accessed=bytes_accessed),
    )(xp, w0_p, w_rest, b_packed)

    # Slice back to the real batch (output width is already the true width).
    return out_padded[:B]


def init_params(key, in_features, dims):
    """Deterministic init mimicking nn.Linear's U(-1/sqrt(fan_in), 1/sqrt(fan_in))."""
    params = []
    fan_ins = (in_features,) + tuple(dims[:-1])
    for fi, fo in zip(fan_ins, dims):
        kw, kb, key = jax.random.split(key, 3)
        bound = 1.0 / jnp.sqrt(jnp.float32(fi))
        w = jax.random.uniform(kw, (fi, fo), jnp.float32, -bound, bound)
        b = jax.random.uniform(kb, (1, fo), jnp.float32, -bound, bound)
        params.append((w, b))
    return params


def mlp_reference(x, params):
    h = x
    for (w, b) in params:
        h = jnp.maximum(h @ w + b, 0.0)
    return h


if __name__ == "__main__":
    key = jax.random.PRNGKey(0)
    kx, kp = jax.random.split(key)

    # Small shapes consistent with the module: MLP(input_shape=(32,), dims=(64,48,32,16))
    batch = 8
    in_features = 32
    dims = (64, 48, 32, 16)

    x = jax.random.normal(kx, (batch, in_features), jnp.float32)
    params = init_params(kp, in_features, dims)

    out = mlp_forward(x, params)
    out = jax.block_until_ready(out)

    ref = mlp_reference(x, params)
    assert out.shape == (batch, dims[-1])
    # bf16 matmul inputs (f32 accumulate) -> loosened tolerance vs f32 reference.
    assert jnp.allclose(out, ref, atol=2e-2, rtol=2e-2), (
        f"max abs err {jnp.max(jnp.abs(out - ref))}")

    print("KERNEL_OK")
</pallas_src>

<mosaic_0001>
module attributes {stable_mosaic.version = 11 : i64} {
  func.func @mlp_kernel(%arg0: i32, %arg1: memref<16x32xbf16, #tpu.memory_space<vmem>>, %arg2: memref<32x128xbf16, #tpu.memory_space<vmem>>, %arg3: memref<3x128x128xbf16, #tpu.memory_space<vmem>>, %arg4: memref<4x1x128xf32, #tpu.memory_space<vmem>>, %arg5: memref<16x16xf32, #tpu.memory_space<vmem>>) attributes {dimension_semantics = [#tpu.dimension_semantics<parallel>], iteration_bounds = array<i64: 1>, scalar_prefetch = 0 : i64, scratch_operands = 0 : i64, tpu.core_type = #tpu.core_type<tc>, window_params = [{transform_indices = @transform_0, window_bounds = array<i64: 16, 32>}, {pipeline_mode = #tpu.pipeline_mode<synchronous>, transform_indices = @transform_1, window_bounds = array<i64: 32, 128>}, {pipeline_mode = #tpu.pipeline_mode<synchronous>, transform_indices = @transform_2, window_bounds = array<i64: 3, 128, 128>}, {pipeline_mode = #tpu.pipeline_mode<synchronous>, transform_indices = @transform_3, window_bounds = array<i64: 4, 1, 128>}, {transform_indices = @transform_4, window_bounds = array<i64: 16, 16>}]} {
    %c0 = arith.constant 0 : index
    %c0_0 = arith.constant 0 : index
    %0 = vector.load %arg1[%c0, %c0_0] : memref<16x32xbf16, #tpu.memory_space<vmem>>, vector<16x32xbf16>
    %c0_1 = arith.constant 0 : index
    %c0_2 = arith.constant 0 : index
    %1 = vector.load %arg2[%c0_1, %c0_2] : memref<32x128xbf16, #tpu.memory_space<vmem>>, vector<32x128xbf16>
    %cst = arith.constant dense<0.000000e+00> : vector<16x128xf32>
    %2 = tpu.matmul %0, %1, %cst {dimension_numbers = #tpu.dot_dimension_numbers<[1], [0], [0], [1], [0, 0, 1, 1], [], []>} : vector<16x32xbf16>, vector<32x128xbf16>, vector<16x128xf32> -> vector<16x128xf32>
    %c0_3 = arith.constant 0 : index
    %c0_4 = arith.constant 0 : index
    %c0_5 = arith.constant 0 : index
    %3 = vector.load %arg4[%c0_3, %c0_4, %c0_5] : memref<4x1x128xf32, #tpu.memory_space<vmem>>, vector<1x1x128xf32>
    %4 = vector.shape_cast %3 : vector<1x1x128xf32> to vector<1x128xf32>
    %5 = vector.broadcast %4 : vector<1x128xf32> to vector<16x128xf32>
    %6 = arith.addf %2, %5 : vector<16x128xf32>
    %cst_6 = arith.constant 0.000000e+00 : f32
    %7 = vector.broadcast %cst_6 : f32 to vector<16x128xf32>
    %8 = arith.maximumf %6, %7 : vector<16x128xf32>
    %9 = arith.truncf %8 : vector<16x128xf32> to vector<16x128xbf16>
    %c0_7 = arith.constant 0 : index
    %c0_8 = arith.constant 0 : index
    %c0_9 = arith.constant 0 : index
    %10 = vector.load %arg3[%c0_7, %c0_8, %c0_9] : memref<3x128x128xbf16, #tpu.memory_space<vmem>>, vector<1x128x128xbf16>
    %11 = vector.shape_cast %10 : vector<1x128x128xbf16> to vector<128x128xbf16>
    %cst_10 = arith.constant dense<0.000000e+00> : vector<16x128xf32>
    %12 = tpu.matmul %9, %11, %cst_10 {dimension_numbers = #tpu.dot_dimension_numbers<[1], [0], [0], [1], [0, 0, 1, 1], [], []>} : vector<16x128xbf16>, vector<128x128xbf16>, vector<16x128xf32> -> vector<16x128xf32>
    %c1 = arith.constant 1 : index
    %c0_11 = arith.constant 0 : index
    %c0_12 = arith.constant 0 : index
    %13 = vector.load %arg4[%c1, %c0_11, %c0_12] : memref<4x1x128xf32, #tpu.memory_space<vmem>>, vector<1x1x128xf32>
    %14 = vector.shape_cast %13 : vector<1x1x128xf32> to vector<1x128xf32>
    %15 = vector.broadcast %14 : vector<1x128xf32> to vector<16x128xf32>
    %16 = arith.addf %12, %15 : vector<16x128xf32>
    %cst_13 = arith.constant 0.000000e+00 : f32
    %17 = vector.broadcast %cst_13 : f32 to vector<16x128xf32>
    %18 = arith.maximumf %16, %17 : vector<16x128xf32>
    %19 = arith.truncf %18 : vector<16x128xf32> to vector<16x128xbf16>
    %c1_14 = arith.constant 1 : index
    %c0_15 = arith.constant 0 : index
    %c0_16 = arith.constant 0 : index
    %20 = vector.load %arg3[%c1_14, %c0_15, %c0_16] : memref<3x128x128xbf16, #tpu.memory_space<vmem>>, vector<1x128x128xbf16>
    %21 = vector.shape_cast %20 : vector<1x128x128xbf16> to vector<128x128xbf16>
    %cst_17 = arith.constant dense<0.000000e+00> : vector<16x128xf32>
    %22 = tpu.matmul %19, %21, %cst_17 {dimension_numbers = #tpu.dot_dimension_numbers<[1], [0], [0], [1], [0, 0, 1, 1], [], []>} : vector<16x128xbf16>, vector<128x128xbf16>, vector<16x128xf32> -> vector<16x128xf32>
    %c2 = arith.constant 2 : index
    %c0_18 = arith.constant 0 : index
    %c0_19 = arith.constant 0 : index
    %23 = vector.load %arg4[%c2, %c0_18, %c0_19] : memref<4x1x128xf32, #tpu.memory_space<vmem>>, vector<1x1x128xf32>
    %24 = vector.shape_cast %23 : vector<1x1x128xf32> to vector<1x128xf32>
    %25 = vector.broadcast %24 : vector<1x128xf32> to vector<16x128xf32>
    %26 = arith.addf %22, %25 : vector<16x128xf32>
    %cst_20 = arith.constant 0.000000e+00 : f32
    %27 = vector.broadcast %cst_20 : f32 to vector<16x128xf32>
    %28 = arith.maximumf %26, %27 : vector<16x128xf32>
    %29 = arith.truncf %28 : vector<16x128xf32> to vector<16x128xbf16>
    %c2_21 = arith.constant 2 : index
    %c0_22 = arith.constant 0 : index
    %c0_23 = arith.constant 0 : index
    %30 = vector.load %arg3[%c2_21, %c0_22, %c0_23] : memref<3x128x128xbf16, #tpu.memory_space<vmem>>, vector<1x128x128xbf16>
    %31 = vector.shape_cast %30 : vector<1x128x128xbf16> to vector<128x128xbf16>
    %cst_24 = arith.constant dense<0.000000e+00> : vector<16x128xf32>
    %32 = tpu.matmul %29, %31, %cst_24 {dimension_numbers = #tpu.dot_dimension_numbers<[1], [0], [0], [1], [0, 0, 1, 1], [], []>} : vector<16x128xbf16>, vector<128x128xbf16>, vector<16x128xf32> -> vector<16x128xf32>
    %c3 = arith.constant 3 : index
    %c0_25 = arith.constant 0 : index
    %c0_26 = arith.constant 0 : index
    %33 = vector.load %arg4[%c3, %c0_25, %c0_26] : memref<4x1x128xf32, #tpu.memory_space<vmem>>, vector<1x1x128xf32>
    %34 = vector.shape_cast %33 : vector<1x1x128xf32> to vector<1x128xf32>
    %35 = vector.broadcast %34 : vector<1x128xf32> to vector<16x128xf32>
    %36 = arith.addf %32, %35 : vector<16x128xf32>
    %cst_27 = arith.constant 0.000000e+00 : f32
    %37 = vector.broadcast %cst_27 : f32 to vector<16x128xf32>
    %38 = arith.maximumf %36, %37 : vector<16x128xf32>
    %39 = vector.extract_strided_slice %38 {offsets = [0, 0], sizes = [16, 16], strides = [1, 1]} : vector<16x128xf32> to vector<16x16xf32>
    %c0_28 = arith.constant 0 : index
    %c0_29 = arith.constant 0 : index
    %40 = vector.load %arg5[%c0_28, %c0_29] : memref<16x16xf32, #tpu.memory_space<vmem>>, vector<16x16xf32>
    tpu.vector_store %arg5[%c0_28, %c0_29], %39 {strides = array<i32>} : memref<16x16xf32, #tpu.memory_space<vmem>>, vector<16x16xf32>,
    return
  }
  func.func @transform_0(%arg0: i32) -> (i32, i32) {
    %c0_i32 = arith.constant 0 : i32
    %c0_i32_0 = arith.constant 0 : i32
    return %arg0, %c0_i32 : i32, i32
  }
  func.func @transform_1(%arg0: i32) -> (i32, i32) {
    %c0_i32 = arith.constant 0 : i32
    %c0_i32_0 = arith.constant 0 : i32
    %c0_i32_1 = arith.constant 0 : i32
    return %c0_i32, %c0_i32_0 : i32, i32
  }
  func.func @transform_2(%arg0: i32) -> (i32, i32, i32) {
    %c0_i32 = arith.constant 0 : i32
    %c0_i32_0 = arith.constant 0 : i32
    %c0_i32_1 = arith.constant 0 : i32
    %c0_i32_2 = arith.constant 0 : i32
    return %c0_i32, %c0_i32_0, %c0_i32_1 : i32, i32, i32
  }
  func.func @transform_3(%arg0: i32) -> (i32, i32, i32) {
    %c0_i32 = arith.constant 0 : i32
    %c0_i32_0 = arith.constant 0 : i32
    %c0_i32_1 = arith.constant 0 : i32
    %c0_i32_2 = arith.constant 0 : i32
    return %c0_i32, %c0_i32_0, %c0_i32_1 : i32, i32, i32
  }
  func.func @transform_4(%arg0: i32) -> (i32, i32) {
    %c0_i32 = arith.constant 0 : i32
    %c0_i32_0 = arith.constant 0 : i32
    return %arg0, %c0_i32 : i32, i32
  }
}

</mosaic_0001>

<llo_original>
// kernel: tpu_custom_call.1
$region0: #{tpu_custom_call.1}
  #allocation0 [shape = 'u32[]', space=smem, size = 0x4, offset = 0x4, fixed_abs, tag = 'smem constant byte address 0x4 - core index']
  #allocation1 [shape = 'u32[144,128]{1,0:T(1,128)}', space=vmem, size = 0x12000, scoped, tag = 'internal scratch']
  %s0 = inlined_call_operand.hbm [shape: bf16[16,32], index: 0, kind: input, shape index: {}]
  %s1 = inlined_call_operand.hbm [shape: bf16[32,128], index: 1, kind: input, shape index: {}]
  %s2 = inlined_call_operand.hbm [shape: bf16[3,128,128], index: 2, kind: input, shape index: {}]
  %s3 = inlined_call_operand.vmem [shape: f32[4,1,128], index: 3, kind: input, shape index: {}]
  %s4 = inlined_call_operand.hbm [shape: f32[16,16], index: 4, kind: output, shape index: {}]
  %s5 = sld [smem:[#allocation0]]
  $region38: #{tpu_custom_call.1} parent=0
    _
  %s7 = ssub.s32 1, %s5
  %s8 = scalar_select 0, %s7, %s5
  $region1: #{tpu_custom_call.1} parent=0
    #allocation2 [shape = 'u8[4096]{0}', space=vmem, size = 0x1000, scoped, tag = 'input window, operand 0, single buffered']
    #allocation3 [shape = 's32[1]{0}', space=sflag, size = 0x4, scoped, tag = 'scoped memory for tpu_custom_call.1']
    #allocation4 [shape = 's32[1]{0}', space=sflag, size = 0x4, scoped, tag = 'scoped memory for tpu_custom_call.1']
    #allocation5 [shape = 'u8[8192]{0}', space=vmem, size = 0x2000, scoped, tag = 'input window, operand 1, single buffered']
    #allocation6 [shape = 's32[1]{0}', space=sflag, size = 0x4, scoped, tag = 'scoped memory for tpu_custom_call.1']
    #allocation7 [shape = 'u8[98304]{0}', space=vmem, size = 0x18000, scoped, tag = 'input window, operand 2, single buffered']
    #allocation8 [shape = 'u8[8192]{0}', space=vmem, size = 0x2000, scoped, tag = 'output window, operand 0, single buffered']
    %9 = vsyncpa [#allocation3], 0
    %10 = vsyncpa [#allocation6], 0
    %11 = vsyncpa [#allocation4], 0
    // Predicated region
    $region2: #{tpu_custom_call.1} parent=1 // pred_check
      _
    $region3: #{tpu_custom_call.1} parent=1 // pred_check_branch
      %13 = sbr.rel (0) target = $region5
    $region4: #{tpu_custom_call.1} parent=1 // pred_region
      %s15 = ssub.s32 128, 128
      %16 = vsyncadd [#allocation3], %s15
      %s17 = sshll.u32 [#allocation2], 4
      %s18 = int_to_ptr.vmem [resolvable:$true] %s17
      %23 = dma.hbm_to_vmem [thread:$0]  %s0, 128, %s18, [#allocation3], 64, 64, 4
    $region5: #{tpu_custom_call.1} parent=1 // pred_fallthru
      _
    // Predicated region
    $region6: #{tpu_custom_call.1} parent=1 // pred_check
      _
    $region7: #{tpu_custom_call.1} parent=1 // pred_check_branch
      %25 = sbr.rel (0) target = $region9
    $region8: #{tpu_custom_call.1} parent=1 // pred_region
      %s27 = ssub.s32 256, 256
      %28 = vsyncadd [#allocation6], %s27
      %s29 = sshll.u32 [#allocation5], 4
      %s30 = int_to_ptr.vmem [resolvable:$true] %s29
      %35 = dma.hbm_to_vmem [thread:$0]  %s1, 256, %s30, [#allocation6], 64, 64, 4
    $region9: #{tpu_custom_call.1} parent=1 // pred_fallthru
      _
    // Predicated region
    $region10: #{tpu_custom_call.1} parent=1 // pred_check
      _
    $region11: #{tpu_custom_call.1} parent=1 // pred_check_branch
      %37 = sbr.rel (0) target = $region13
    $region12: #{tpu_custom_call.1} parent=1 // pred_region
      %s39 = ssub.s32 3072, 3072
      %40 = vsyncadd [#allocation6], %s39
      %s41 = sshll.u32 [#allocation7], 4
      %s42 = int_to_ptr.vmem [resolvable:$true] %s41
      %47 = dma.hbm_to_vmem [thread:$0]  %s2, 3072, %s42, [#allocation6], 64, 64, 4
    $region13: #{tpu_custom_call.1} parent=1 // pred_fallthru
      _
    // Predicated region
    $region14: #{tpu_custom_call.1} parent=1 // pred_check
      _
    $region15: #{tpu_custom_call.1} parent=1 // pred_check_branch
      %49 = sbr.rel (0) target = $region17
    $region16: #{tpu_custom_call.1} parent=1 // pred_region
      _
    $region17: #{tpu_custom_call.1} parent=1 // pred_fallthru
      _
    // Predicated region
    $region18: #{tpu_custom_call.1} parent=1 // pred_check
      _
    $region19: #{tpu_custom_call.1} parent=1 // pred_check_branch
      %51 = sbr.rel (0) target = $region21
    $region20: #{tpu_custom_call.1} parent=1 // pred_region
      %52 = dma.done [#allocation3], 128
    $region21: #{tpu_custom_call.1} parent=1 // pred_fallthru
      _
    // Predicated region
    $region22: #{tpu_custom_call.1} parent=1 // pred_check
      _
    $region23: #{tpu_custom_call.1} parent=1 // pred_check_branch
      %54 = sbr.rel (0) target = $region25
    $region24: #{tpu_custom_call.1} parent=1 // pred_region
      %55 = dma.done [#allocation6], 256
    $region25: #{tpu_custom_call.1} parent=1 // pred_fallthru
      _
    // Predicated region
    $region26: #{tpu_custom_call.1} parent=1 // pred_check
      _
    $region27: #{tpu_custom_call.1} parent=1 // pred_check_branch
      %57 = sbr.rel (0) target = $region29
    $region28: #{tpu_custom_call.1} parent=1 // pred_region
      %58 = dma.done [#allocation6], 3072
    $region29: #{tpu_custom_call.1} parent=1 // pred_fallthru
      _
    %v60 = vld [vmem:[#allocation2] sm:$0xf]
    %v61 = vld [vmem:[#allocation2 + $0x4] sm:$0xf]
    %v62 = vld [vmem:[#allocation5] sm:$0xf]
    %v63 = vld [vmem:[#allocation5 + $0x4] sm:$0xf]
    %v64 = vld [vmem:[#allocation5 + $0x8] sm:$0xf]
    %v65 = vld [vmem:[#allocation5 + $0xc] sm:$0xf]
    %v66 = vld [vmem:[%s3] sm:$0x1]
    %v68 = vlaneseq
    %v69 = vshrl.u32 %v68, 7
    %v70 = vsub.s32 0, %v69
    %v71 = vrot.slane %v66, %v70
    %v75 = vunpack.c.l.b16 %v60
    %v76 = vunpack.c.l.b16 %v61
    %v77 = vpack.c.b16 %v76, %v75
    %v82 = vunpack.c.l.b16 %v62
    %v83 = vunpack.c.l.b16 %v63
    %v84 = vunpack.c.l.b16 %v64
    %v85 = vunpack.c.l.b16 %v65
    %v86 = vpack.c.b16 %v83, %v82
    %v87 = vpack.c.b16 %v85, %v84
    %vm90 = vcmask 261120
    %v92 = vsel %vm90, %v77, 0
    %94 = vmatprep.subr.bf16.mxu0 0
    %95 = vmatpush1.bf16.msra.mxu0 %v86
    %96 = vmatprep.subr.bf16.mxu0 0
    %97 = vmatpush1.bf16.msra.mxu0 %v87
    %98 = vmatprep.subr.bf16.mxu0 0
    %99 = vmatpush1.bf16.msra.mxu0 0
    %100 = vmatprep.subr.bf16.mxu0 0
    %101 = vmatpush1.bf16.msra.mxu0 0
    %102 = vmatprep.subr.bf16.mxu0 0
    %103 = vmatpush1.bf16.msra.mxu0 0
    %104 = vmatprep.subr.bf16.mxu0 0
    %105 = vmatpush1.bf16.msra.mxu0 0
    %106 = vmatprep.subr.bf16.mxu0 0
    %107 = vmatpush1.bf16.msra.mxu0 0
    %108 = vmatprep.subr.bf16.mxu0 0
    %109 = vmatpush1.bf16.msra.mxu0 0
    %110 = vmatprep.subr.bf16.mxu0 0
    %111 = vmatpush1.bf16.msra.mxu0 0
    %112 = vmatprep.subr.bf16.mxu0 0
    %113 = vmatpush1.bf16.msra.mxu0 0
    %114 = vmatprep.subr.bf16.mxu0 0
    %115 = vmatpush1.bf16.msra.mxu0 0
    %116 = vmatprep.subr.bf16.mxu0 0
    %117 = vmatpush1.bf16.msra.mxu0 0
    %118 = vmatprep.subr.bf16.mxu0 0
    %119 = vmatpush1.bf16.msra.mxu0 0
    %120 = vmatprep.subr.bf16.mxu0 0
    %121 = vmatpush1.bf16.msra.mxu0 0
    %122 = vmatprep.subr.bf16.mxu0 0
    %123 = vmatpush1.bf16.msra.mxu0 0
    %124 = vmatprep.subr.bf16.mxu0 0
    %125 = vmatpush1.bf16.msra.mxu0 0
    %126 = vmatprep.mubr.bf16.mxu0 0
    %127 = vmatmul.mubr.bf16.gmra.mrb[0].mxu0 %v92
    %v128 = vpop.f32.mrb[0].mxu0
    %v129 = vadd.f32 %v71, %v128
    %v130 = vpop.f32.mrb[0].mxu0
    %v131 = vpop.f32.mrb[0].mxu0
    %v132 = vadd.f32 %v71, %v131
    %v133 = vpop.f32.mrb[0].mxu0
    %134 = vdwg.mxu0
    %v135 = vmax.f32 %v129, 0.0
    %v136 = vmax.f32 %v132, 0.0
    %v137 = vpack.c.bf16 %v136, %v135
    %v138 = vld [vmem:[#allocation7] sm:$0xf]
    %v139 = vld [vmem:[#allocation7 + $0x4] sm:$0xf]
    %v140 = vld [vmem:[#allocation7 + $0x8] sm:$0xf]
    %v141 = vld [vmem:[#allocation7 + $0xc] sm:$0xf]
    %v142 = vld [vmem:[#allocation7 + $0x10] sm:$0xf]
    %v143 = vld [vmem:[#allocation7 + $0x14] sm:$0xf]
    %v144 = vld [vmem:[#allocation7 + $0x18] sm:$0xf]
    %v145 = vld [vmem:[#allocation7 + $0x1c] sm:$0xf]
    %v146 = vld [vmem:[#allocation7 + $0x20] sm:$0xf]
    %v147 = vld [vmem:[#allocation7 + $0x24] sm:$0xf]
    %v148 = vld [vmem:[#allocation7 + $0x28] sm:$0xf]
    %v149 = vld [vmem:[#allocation7 + $0x2c] sm:$0xf]
    %v150 = vld [vmem:[#allocation7 + $0x30] sm:$0xf]
    %v151 = vld [vmem:[#allocation7 + $0x34] sm:$0xf]
    %v152 = vld [vmem:[#allocation7 + $0x38] sm:$0xf]
    %v153 = vld [vmem:[#allocation7 + $0x3c] sm:$0xf]
    %s154 = scalar_lea.vmem %s3, 1
    %v155 = vld [vmem:[%s154] sm:$0x1]
    %v157 = vlaneseq
    %v158 = vshrl.u32 %v157, 7
    %v159 = vsub.s32 0, %v158
    %v160 = vrot.slane %v155, %v159
    %v178 = vunpack.c.l.b16 %v138
    %v179 = vunpack.c.l.b16 %v139
    %v180 = vunpack.c.l.b16 %v140
    %v181 = vunpack.c.l.b16 %v141
    %v182 = vunpack.c.l.b16 %v142
    %v183 = vunpack.c.l.b16 %v143
    %v184 = vunpack.c.l.b16 %v144
    %v185 = vunpack.c.l.b16 %v145
    %v186 = vunpack.c.l.b16 %v146
    %v187 = vunpack.c.l.b16 %v147
    %v188 = vunpack.c.l.b16 %v148
    %v189 = vunpack.c.l.b16 %v149
    %v190 = vunpack.c.l.b16 %v150
    %v191 = vunpack.c.l.b16 %v151
    %v192 = vunpack.c.l.b16 %v152
    %v193 = vunpack.c.l.b16 %v153
    %v194 = vpack.c.b16 %v179, %v178
    %v195 = vpack.c.b16 %v181, %v180
    %v196 = vpack.c.b16 %v183, %v182
    %v197 = vpack.c.b16 %v185, %v184
    %v198 = vpack.c.b16 %v187, %v186
    %v199 = vpack.c.b16 %v189, %v188
    %v200 = vpack.c.b16 %v191, %v190
    %v201 = vpack.c.b16 %v193, %v192
    %210 = vmatprep.subr.bf16.mxu0 0
    %211 = vmatpush1.bf16.msra.mxu0 %v194
    %212 = vmatprep.subr.bf16.mxu0 0
    %213 = vmatpush1.bf16.msra.mxu0 %v195
    %214 = vmatprep.subr.bf16.mxu0 0
    %215 = vmatpush1.bf16.msra.mxu0 %v196
    %216 = vmatprep.subr.bf16.mxu0 0
    %217 = vmatpush1.bf16.msra.mxu0 %v197
    %218 = vmatprep.subr.bf16.mxu0 0
    %219 = vmatpush1.bf16.msra.mxu0 %v198
    %220 = vmatprep.subr.bf16.mxu0 0
    %221 = vmatpush1.bf16.msra.mxu0 %v199
    %222 = vmatprep.subr.bf16.mxu0 0
    %223 = vmatpush1.bf16.msra.mxu0 %v200
    %224 = vmatprep.subr.bf16.mxu0 0
    %225 = vmatpush1.bf16.msra.mxu0 %v201
    %226 = vmatprep.subr.bf16.mxu0 0
    %227 = vmatpush1.bf16.msra.mxu0 0
    %228 = vmatprep.subr.bf16.mxu0 0
    %229 = vmatpush1.bf16.msra.mxu0 0
    %230 = vmatprep.subr.bf16.mxu0 0
    %231 = vmatpush1.bf16.msra.mxu0 0
    %232 = vmatprep.subr.bf16.mxu0 0
    %233 = vmatpush1.bf16.msra.mxu0 0
    %234 = vmatprep.subr.bf16.mxu0 0
    %235 = vmatpush1.bf16.msra.mxu0 0
    %236 = vmatprep.subr.bf16.mxu0 0
    %237 = vmatpush1.bf16.msra.mxu0 0
    %238 = vmatprep.subr.bf16.mxu0 0
    %239 = vmatpush1.bf16.msra.mxu0 0
    %240 = vmatprep.subr.bf16.mxu0 0
    %241 = vmatpush1.bf16.msra.mxu0 0
    %242 = vmatprep.mubr.bf16.mxu0 0
    %243 = vmatmul.mubr.bf16.gmra.mrb[0].mxu0 %v137
    %v244 = vpop.f32.mrb[0].mxu0
    %v245 = vadd.f32 %v160, %v244
    %v246 = vpop.f32.mrb[0].mxu0
    %v247 = vpop.f32.mrb[0].mxu0
    %v248 = vadd.f32 %v160, %v247
    %v249 = vpop.f32.mrb[0].mxu0
    %250 = vdwg.mxu0
    %v251 = vmax.f32 %v245, 0.0
    %v252 = vmax.f32 %v248, 0.0
    %v253 = vpack.c.bf16 %v252, %v251
    %s254 = scalar_lea.vmem [#allocation7], 64
    %v255 = vld [vmem:[%s254] sm:$0xf]
    %v256 = vld [vmem:[%s254 + $0x4] sm:$0xf]
    %v257 = vld [vmem:[%s254 + $0x8] sm:$0xf]
    %v258 = vld [vmem:[%s254 + $0xc] sm:$0xf]
    %v259 = vld [vmem:[%s254 + $0x10] sm:$0xf]
    %v260 = vld [vmem:[%s254 + $0x14] sm:$0xf]
    %v261 = vld [vmem:[%s254 + $0x18] sm:$0xf]
    %v262 = vld [vmem:[%s254 + $0x1c] sm:$0xf]
    %v263 = vld [vmem:[%s254 + $0x20] sm:$0xf]
    %v264 = vld [vmem:[%s254 + $0x24] sm:$0xf]
    %v265 = vld [vmem:[%s254 + $0x28] sm:$0xf]
    %v266 = vld [vmem:[%s254 + $0x2c] sm:$0xf]
    %v267 = vld [vmem:[%s254 + $0x30] sm:$0xf]
    %v268 = vld [vmem:[%s254 + $0x34] sm:$0xf]
    %v269 = vld [vmem:[%s254 + $0x38] sm:$0xf]
    %v270 = vld [vmem:[%s254 + $0x3c] sm:$0xf]
    %s271 = scalar_lea.vmem %s3, 2
    %v272 = vld [vmem:[%s271] sm:$0x1]
    %v274 = vlaneseq
    %v275 = vshrl.u32 %v274, 7
    %v276 = vsub.s32 0, %v275
    %v277 = vrot.slane %v272, %v276
    %v295 = vunpack.c.l.b16 %v255
    %v296 = vunpack.c.l.b16 %v256
    %v297 = vunpack.c.l.b16 %v257
    %v298 = vunpack.c.l.b16 %v258
    %v299 = vunpack.c.l.b16 %v259
    %v300 = vunpack.c.l.b16 %v260
    %v301 = vunpack.c.l.b16 %v261
    %v302 = vunpack.c.l.b16 %v262
    %v303 = vunpack.c.l.b16 %v263
    %v304 = vunpack.c.l.b16 %v264
    %v305 = vunpack.c.l.b16 %v265
    %v306 = vunpack.c.l.b16 %v266
    %v307 = vunpack.c.l.b16 %v267
    %v308 = vunpack.c.l.b16 %v268
    %v309 = vunpack.c.l.b16 %v269
    %v310 = vunpack.c.l.b16 %v270
    %v311 = vpack.c.b16 %v296, %v295
    %v312 = vpack.c.b16 %v298, %v297
    %v313 = vpack.c.b16 %v300, %v299
    %v314 = vpack.c.b16 %v302, %v301
    %v315 = vpack.c.b16 %v304, %v303
    %v316 = vpack.c.b16 %v306, %v305
    %v317 = vpack.c.b16 %v308, %v307
    %v318 = vpack.c.b16 %v310, %v309
    %327 = vmatprep.subr.bf16.mxu0 0
    %328 = vmatpush1.bf16.msra.mxu0 %v311
    %329 = vmatprep.subr.bf16.mxu0 0
    %330 = vmatpush1.bf16.msra.mxu0 %v312
    %331 = vmatprep.subr.bf16.mxu0 0
    %332 = vmatpush1.bf16.msra.mxu0 %v313
    %333 = vmatprep.subr.bf16.mxu0 0
    %334 = vmatpush1.bf16.msra.mxu0 %v314
    %335 = vmatprep.subr.bf16.mxu0 0
    %336 = vmatpush1.bf16.msra.mxu0 %v315
    %337 = vmatprep.subr.bf16.mxu0 0
    %338 = vmatpush1.bf16.msra.mxu0 %v316
    %339 = vmatprep.subr.bf16.mxu0 0
    %340 = vmatpush1.bf16.msra.mxu0 %v317
    %341 = vmatprep.subr.bf16.mxu0 0
    %342 = vmatpush1.bf16.msra.mxu0 %v318
    %343 = vmatprep.subr.bf16.mxu0 0
    %344 = vmatpush1.bf16.msra.mxu0 0
    %345 = vmatprep.subr.bf16.mxu0 0
    %346 = vmatpush1.bf16.msra.mxu0 0
    %347 = vmatprep.subr.bf16.mxu0 0
    %348 = vmatpush1.bf16.msra.mxu0 0
    %349 = vmatprep.subr.bf16.mxu0 0
    %350 = vmatpush1.bf16.msra.mxu0 0
    %351 = vmatprep.subr.bf16.mxu0 0
    %352 = vmatpush1.bf16.msra.mxu0 0
    %353 = vmatprep.subr.bf16.mxu0 0
    %354 = vmatpush1.bf16.msra.mxu0 0
    %355 = vmatprep.subr.bf16.mxu0 0
    %356 = vmatpush1.bf16.msra.mxu0 0
    %357 = vmatprep.subr.bf16.mxu0 0
    %358 = vmatpush1.bf16.msra.mxu0 0
    %359 = vmatprep.mubr.bf16.mxu0 0
    %360 = vmatmul.mubr.bf16.gmra.mrb[0].mxu0 %v253
    %v361 = vpop.f32.mrb[0].mxu0
    %v362 = vadd.f32 %v277, %v361
    %v363 = vpop.f32.mrb[0].mxu0
    %v364 = vpop.f32.mrb[0].mxu0
    %v365 = vadd.f32 %v277, %v364
    %v366 = vpop.f32.mrb[0].mxu0
    %367 = vdwg.mxu0
    %v368 = vmax.f32 %v362, 0.0
    %v369 = vmax.f32 %v365, 0.0
    %v370 = vpack.c.bf16 %v369, %v368
    %s371 = scalar_lea.vmem [#allocation7], 128
    %v372 = vld [vmem:[%s371] sm:$0xf]
    %v373 = vld [vmem:[%s371 + $0x4] sm:$0xf]
    %v374 = vld [vmem:[%s371 + $0x8] sm:$0xf]
    %v375 = vld [vmem:[%s371 + $0xc] sm:$0xf]
    %v376 = vld [vmem:[%s371 + $0x10] sm:$0xf]
    %v377 = vld [vmem:[%s371 + $0x14] sm:$0xf]
    %v378 = vld [vmem:[%s371 + $0x18] sm:$0xf]
    %v379 = vld [vmem:[%s371 + $0x1c] sm:$0xf]
    %v380 = vld [vmem:[%s371 + $0x20] sm:$0xf]
    %v381 = vld [vmem:[%s371 + $0x24] sm:$0xf]
    %v382 = vld [vmem:[%s371 + $0x28] sm:$0xf]
    %v383 = vld [vmem:[%s371 + $0x2c] sm:$0xf]
    %v384 = vld [vmem:[%s371 + $0x30] sm:$0xf]
    %v385 = vld [vmem:[%s371 + $0x34] sm:$0xf]
    %v386 = vld [vmem:[%s371 + $0x38] sm:$0xf]
    %v387 = vld [vmem:[%s371 + $0x3c] sm:$0xf]
    %s388 = scalar_lea.vmem %s3, 3
    %v389 = vld [vmem:[%s388] sm:$0x1]
    %v391 = vlaneseq
    %v392 = vshrl.u32 %v391, 7
    %v393 = vsub.s32 0, %v392
    %v394 = vrot.slane %v389, %v393
    %v412 = vunpack.c.l.b16 %v372
    %v413 = vunpack.c.l.b16 %v373
    %v414 = vunpack.c.l.b16 %v374
    %v415 = vunpack.c.l.b16 %v375
    %v416 = vunpack.c.l.b16 %v376
    %v417 = vunpack.c.l.b16 %v377
    %v418 = vunpack.c.l.b16 %v378
    %v419 = vunpack.c.l.b16 %v379
    %v420 = vunpack.c.l.b16 %v380
    %v421 = vunpack.c.l.b16 %v381
    %v422 = vunpack.c.l.b16 %v382
    %v423 = vunpack.c.l.b16 %v383
    %v424 = vunpack.c.l.b16 %v384
    %v425 = vunpack.c.l.b16 %v385
    %v426 = vunpack.c.l.b16 %v386
    %v427 = vunpack.c.l.b16 %v387
    %v428 = vpack.c.b16 %v413, %v412
    %v429 = vpack.c.b16 %v415, %v414
    %v430 = vpack.c.b16 %v417, %v416
    %v431 = vpack.c.b16 %v419, %v418
    %v432 = vpack.c.b16 %v421, %v420
    %v433 = vpack.c.b16 %v423, %v422
    %v434 = vpack.c.b16 %v425, %v424
    %v435 = vpack.c.b16 %v427, %v426
    %444 = vmatprep.subr.bf16.mxu0 0
    %445 = vmatpush1.bf16.msra.mxu0 %v428
    %446 = vmatprep.subr.bf16.mxu0 0
    %447 = vmatpush1.bf16.msra.mxu0 %v429
    %448 = vmatprep.subr.bf16.mxu0 0
    %449 = vmatpush1.bf16.msra.mxu0 %v430
    %450 = vmatprep.subr.bf16.mxu0 0
    %451 = vmatpush1.bf16.msra.mxu0 %v431
    %452 = vmatprep.subr.bf16.mxu0 0
    %453 = vmatpush1.bf16.msra.mxu0 %v432
    %454 = vmatprep.subr.bf16.mxu0 0
    %455 = vmatpush1.bf16.msra.mxu0 %v433
    %456 = vmatprep.subr.bf16.mxu0 0
    %457 = vmatpush1.bf16.msra.mxu0 %v434
    %458 = vmatprep.subr.bf16.mxu0 0
    %459 = vmatpush1.bf16.msra.mxu0 %v435
    %460 = vmatprep.subr.bf16.mxu0 0
    %461 = vmatpush1.bf16.msra.mxu0 0
    %462 = vmatprep.subr.bf16.mxu0 0
    %463 = vmatpush1.bf16.msra.mxu0 0
    %464 = vmatprep.subr.bf16.mxu0 0
    %465 = vmatpush1.bf16.msra.mxu0 0
    %466 = vmatprep.subr.bf16.mxu0 0
    %467 = vmatpush1.bf16.msra.mxu0 0
    %468 = vmatprep.subr.bf16.mxu0 0
    %469 = vmatpush1.bf16.msra.mxu0 0
    %470 = vmatprep.subr.bf16.mxu0 0
    %471 = vmatpush1.bf16.msra.mxu0 0
    %472 = vmatprep.subr.bf16.mxu0 0
    %473 = vmatpush1.bf16.msra.mxu0 0
    %474 = vmatprep.subr.bf16.mxu0 0
    %475 = vmatpush1.bf16.msra.mxu0 0
    %476 = vmatprep.mubr.bf16.mxu0 0
    %477 = vmatmul.mubr.bf16.gmra.mrb[0].mxu0 %v370
    %v478 = vpop.f32.mrb[0].mxu0
    %v479 = vadd.f32 %v394, %v478
    %v480 = vpop.f32.mrb[0].mxu0
    %v481 = vpop.f32.mrb[0].mxu0
    %v482 = vadd.f32 %v394, %v481
    %v483 = vpop.f32.mrb[0].mxu0
    %484 = vdwg.mxu0
    %v485 = vmax.f32 %v479, 0.0
    %v486 = vmax.f32 %v482, 0.0
    %vm487 = vcmask 130048
    %488 = vst.msk [vmem:[#allocation8] sm:$0xff] %vm487, %v485
    %489 = vst.msk [vmem:[#allocation8 + $0x8] sm:$0xff] %vm487, %v486
    // Predicated region
    $region30: #{tpu_custom_call.1} parent=1 // pred_check
      _
    $region31: #{tpu_custom_call.1} parent=1 // pred_check_branch
      %491 = sbr.rel (0) target = $region33
    $region32: #{tpu_custom_call.1} parent=1 // pred_region
      %s493 = ssub.s32 256, 256
      %494 = vsyncadd [#allocation4], %s493
      %s495 = sshll.u32 [#allocation8], 4
      %s496 = int_to_ptr.vmem [resolvable:$true] %s495
      %501 = dma.vmem_to_hbm [thread:$0]  %s496, 256, %s4, [#allocation4], 128, 128, 8
    $region33: #{tpu_custom_call.1} parent=1 // pred_fallthru
      _
    // Predicated region
    $region34: #{tpu_custom_call.1} parent=1 // pred_check
      _
    $region35: #{tpu_custom_call.1} parent=1 // pred_check_branch
      %503 = sbr.rel (0) target = $region37
    $region36: #{tpu_custom_call.1} parent=1 // pred_region
      %504 = dma.done [#allocation4], 256
    $region37: #{tpu_custom_call.1} parent=1 // pred_fallthru
      _
    %505 = vsyncpa [#allocation3], 1
    %506 = vsyncpa [#allocation6], 1
    %507 = vsyncpa [#allocation4], 1

</llo_original>
